<compile_context>
chip_gen: v6e
topology: v6e:2x2x1
jax: 0.10.0
libtpu: 0.0.40
codegen_flags: <defaults>
</compile_context>

<pallas_src>
import jax
import jax.numpy as jnp
from jax.experimental import pallas as pl
from jax.experimental.pallas import tpu as pltpu

_C = 128          # lane width
_TR_MAX = 512     # max rows per grid step (256 KiB per f32 input tile)
_TR_MIN = 16      # keep row tiles a multiple of 16 (bf16-pack safe)
_NCORES = 2       # leading "parallel" grid axis (uses both TCs on v7x)


def _make_kernel(n, tile_rows):
    """Build the kernel with static n / tile_rows baked in via closure."""

    def kernel(params_ref, rel_ref, wt_ref,
               sl_out, so_out, cl_out,
               s_less, s_over, c_less):
        i = pl.program_id(1)

        @pl.when(i == 0)
        def _():
            s_less[...] = jnp.zeros_like(s_less)
            s_over[...] = jnp.zeros_like(s_over)
            c_less[...] = jnp.zeros_like(c_less)

        eps = params_ref[0]
        dur = params_ref[1]
        z_scale = 1.6 / eps                      # hoisted scalar

        rel = rel_ref[...].astype(jnp.float32)
        wt = wt_ref[...].astype(jnp.float32)

        # Padding mask rebuilt in-kernel (no HBM stream for it).
        tile_idx = pl.program_id(0) * pl.num_programs(1) + i
        row_ids = jax.lax.broadcasted_iota(jnp.int32, (tile_rows, _C), 0)
        lane_ids = jax.lax.broadcasted_iota(jnp.int32, (tile_rows, _C), 1)
        flat_idx = tile_idx * (tile_rows * _C) + row_ids * _C + lane_ids
        valid = flat_idx < n

        wt_true = jnp.log1p(wt)                  # torch.log(1 + wt)
        diff = rel - wt_true                     # wt_pred - wt_true

        less_raw = wt < dur
        less = jnp.logical_and(less_raw, valid)
        over = jnp.logical_and(jnp.logical_not(less_raw), valid)

        # branch "less": squared error (1/(2*eps^2) applied in the wrapper)
        sq = diff * diff
        # branch "over": -logsigmoid(1.6 * diff / eps), numerically stable:
        #   -logsigmoid(z) = max(-z, 0) + log1p(exp(-|z|))
        z = diff * z_scale
        nls = jnp.maximum(-z, 0.0) + jnp.log1p(jnp.exp(-jnp.abs(z)))

        zeros = jnp.zeros_like(sq)
        # Elementwise (VPU) accumulation into (8,128) scratch; cross-sublane
        # reduce is deferred to the wrapper.
        s_less[...] += jnp.sum(
            jnp.where(less, sq, zeros).reshape(-1, 8, _C), axis=0)
        s_over[...] += jnp.sum(
            jnp.where(over, nls, zeros).reshape(-1, 8, _C), axis=0)
        c_less[...] += jnp.sum(
            less.astype(jnp.float32).reshape(-1, 8, _C), axis=0)

        @pl.when(i == pl.num_programs(1) - 1)
        def _():
            sl_out[...] = s_less[...].reshape(1, 8, _C)
            so_out[...] = s_over[...].reshape(1, 8, _C)
            cl_out[...] = c_less[...].reshape(1, 8, _C)

    return kernel


def mse_jump(rel_score, wt, duration, eps):
    """Pallas implementation of MSE_jump.forward(rel_score, wt, duration, eps).

    `duration` must be a scalar (python number / 0-d / size-1 array).
    """
    # TODO(synk): per-element `duration` tensors would need an extra tiled
    # input stream; only scalar duration is supported here (as in the module's
    # typical use).
    rel_flat = rel_score.reshape(-1)
    wt_flat = wt.reshape(-1)
    n = rel_flat.size

    rows = max(pl.cdiv(n, _C), 1)
    tile_rows = min(_TR_MAX, pl.cdiv(rows, _TR_MIN) * _TR_MIN)
    rows_p = pl.cdiv(rows, _NCORES * tile_rows) * _NCORES * tile_rows
    padded = rows_p * _C
    inner = rows_p // (_NCORES * tile_rows)      # row-tiles per core

    rel_p = jnp.pad(rel_flat, (0, padded - n)).reshape(rows_p, _C)
    wt_p = jnp.pad(wt_flat, (0, padded - n)).reshape(rows_p, _C)

    eps_s = jnp.asarray(eps, jnp.float32).reshape(())
    dur_s = jnp.asarray(duration, jnp.float32).reshape(())
    params = jnp.stack([eps_s, dur_s])           # (2,) f32 -> SMEM prefetch

    tile_spec = pl.BlockSpec((tile_rows, _C),
                             lambda c, i, p: (c * inner + i, 0))
    part_spec = pl.BlockSpec((1, 8, _C), lambda c, i, p: (c, 0, 0))
    part_shape = jax.ShapeDtypeStruct((_NCORES, 8, _C), jnp.float32)

    sl, so, cl = pl.pallas_call(
        _make_kernel(n, tile_rows),
        out_shape=(part_shape, part_shape, part_shape),
        grid_spec=pltpu.PrefetchScalarGridSpec(
            num_scalar_prefetch=1,
            grid=(_NCORES, inner),
            in_specs=[tile_spec, tile_spec],
            out_specs=(part_spec, part_spec, part_spec),
            scratch_shapes=[pltpu.VMEM((8, _C), jnp.float32)] * 3,
        ),
        compiler_params=pltpu.CompilerParams(
            dimension_semantics=("parallel", "arbitrary")),
    )(params, rel_p, wt_p)

    # Tiny scalar combine outside the kernel (per-core partials -> loss).
    tot_s_less = jnp.sum(sl)
    tot_s_over = jnp.sum(so)
    tot_c_less = jnp.sum(cl)
    tot_c_over = jnp.float32(n) - tot_c_less

    eps_f = jnp.asarray(eps, jnp.float32)
    loss_less = tot_s_less / (2.0 * eps_f * eps_f) / tot_c_less
    loss_over = tot_s_over / tot_c_over
    return loss_less + loss_over


def _reference(rel_score, wt, duration, eps):
    rel = rel_score.astype(jnp.float32)
    wt = wt.astype(jnp.float32)
    dur = jnp.broadcast_to(jnp.asarray(duration, jnp.float32), rel.shape)
    wt_true = jnp.log1p(wt)
    d = rel - wt_true
    less = wt < dur
    over = wt >= dur
    loss_less = (jnp.sum(jnp.where(less, d * d, 0.0))
                 / jnp.sum(less.astype(jnp.float32))) / (2.0 * eps ** 2)
    z = 1.6 * d / eps
    nls = jnp.maximum(-z, 0.0) + jnp.log1p(jnp.exp(-jnp.abs(z)))
    loss_over = jnp.sum(jnp.where(over, nls, 0.0)) / jnp.sum(over.astype(jnp.float32))
    return loss_less + loss_over


if __name__ == "__main__":
    key = jax.random.PRNGKey(0)
    k1, k2 = jax.random.split(key)

    n = 256                                   # small 1D batch of waiting times
    rel_score = jax.random.normal(k1, (n,), jnp.float32) * 0.5 + 0.5
    wt = jax.random.uniform(k2, (n,), jnp.float32, 0.0, 2.0)   # waiting times >= 0
    duration = 1.0                            # scalar threshold
    eps = 0.5

    loss = mse_jump(rel_score, wt, duration, eps)
    jax.block_until_ready(loss)

    ref = _reference(rel_score, wt, duration, eps)
    assert jnp.isfinite(loss), "kernel produced non-finite loss"
    assert jnp.allclose(loss, ref, rtol=1e-5, atol=1e-5), (loss, ref)
    print("KERNEL_OK")
</pallas_src>

<mosaic_0001>
module attributes {stable_mosaic.version = 11 : i64} {
  func.func @kernel(%arg0: i32, %arg1: i32, %arg2: memref<2xf32, #tpu.memory_space<smem>>, %arg3: memref<16x128xf32, #tpu.memory_space<vmem>>, %arg4: memref<16x128xf32, #tpu.memory_space<vmem>>, %arg5: memref<1x8x128xf32, #tpu.memory_space<vmem>>, %arg6: memref<1x8x128xf32, #tpu.memory_space<vmem>>, %arg7: memref<1x8x128xf32, #tpu.memory_space<vmem>>, %arg8: memref<8x128xf32, #tpu.memory_space<vmem>>, %arg9: memref<8x128xf32, #tpu.memory_space<vmem>>, %arg10: memref<8x128xf32, #tpu.memory_space<vmem>>) attributes {dimension_semantics = [#tpu.dimension_semantics<parallel>, #tpu.dimension_semantics<arbitrary>], iteration_bounds = array<i64: 2, 1>, scalar_prefetch = 1 : i64, scratch_operands = 3 : i64, tpu.core_type = #tpu.core_type<tc>, window_params = [{transform_indices = @transform_0, window_bounds = array<i64: 16, 128>}, {transform_indices = @transform_1, window_bounds = array<i64: 16, 128>}, {transform_indices = @transform_2, window_bounds = array<i64: 1, 8, 128>}, {transform_indices = @transform_3, window_bounds = array<i64: 1, 8, 128>}, {transform_indices = @transform_4, window_bounds = array<i64: 1, 8, 128>}]} {
    %c0_i32 = arith.constant 0 : i32
    %0 = arith.cmpi eq, %arg1, %c0_i32 : i32
    %1 = arith.extui %0 : i1 to i32
    %c0_i32_0 = arith.constant 0 : i32
    %2 = arith.cmpi ne, %1, %c0_i32_0 : i32
    scf.if %2 {
      %cst_27 = arith.constant 0.000000e+00 : f32
      %63 = vector.broadcast %cst_27 : f32 to vector<8x128xf32>
      %c0_28 = arith.constant 0 : index
      %c0_29 = arith.constant 0 : index
      %64 = vector.load %arg8[%c0_28, %c0_29] : memref<8x128xf32, #tpu.memory_space<vmem>>, vector<8x128xf32>
      tpu.vector_store %arg8[%c0_28, %c0_29], %63 {strides = array<i32>} : memref<8x128xf32, #tpu.memory_space<vmem>>, vector<8x128xf32>,
      %cst_30 = arith.constant 0.000000e+00 : f32
      %65 = vector.broadcast %cst_30 : f32 to vector<8x128xf32>
      %c0_31 = arith.constant 0 : index
      %c0_32 = arith.constant 0 : index
      %66 = vector.load %arg9[%c0_31, %c0_32] : memref<8x128xf32, #tpu.memory_space<vmem>>, vector<8x128xf32>
      tpu.vector_store %arg9[%c0_31, %c0_32], %65 {strides = array<i32>} : memref<8x128xf32, #tpu.memory_space<vmem>>, vector<8x128xf32>,
      %cst_33 = arith.constant 0.000000e+00 : f32
      %67 = vector.broadcast %cst_33 : f32 to vector<8x128xf32>
      %c0_34 = arith.constant 0 : index
      %c0_35 = arith.constant 0 : index
      %68 = vector.load %arg10[%c0_34, %c0_35] : memref<8x128xf32, #tpu.memory_space<vmem>>, vector<8x128xf32>
      tpu.vector_store %arg10[%c0_34, %c0_35], %67 {strides = array<i32>} : memref<8x128xf32, #tpu.memory_space<vmem>>, vector<8x128xf32>,
    } else {
    }
    %c0 = arith.constant 0 : index
    %3 = memref.load %arg2[%c0] : memref<2xf32, #tpu.memory_space<smem>>
    %c1 = arith.constant 1 : index
    %4 = memref.load %arg2[%c1] : memref<2xf32, #tpu.memory_space<smem>>
    %cst = arith.constant 1.600000e+00 : f32
    %5 = arith.divf %cst, %3 : f32
    %c0_1 = arith.constant 0 : index
    %c0_2 = arith.constant 0 : index
    %6 = vector.load %arg3[%c0_1, %c0_2] : memref<16x128xf32, #tpu.memory_space<vmem>>, vector<16x128xf32>
    %c0_3 = arith.constant 0 : index
    %c0_4 = arith.constant 0 : index
    %7 = vector.load %arg4[%c0_3, %c0_4] : memref<16x128xf32, #tpu.memory_space<vmem>>, vector<16x128xf32>
    %c1_i32 = arith.constant 1 : i32
    %8 = arith.muli %arg0, %c1_i32 : i32
    %9 = arith.addi %8, %arg1 : i32
    %10 = tpu.iota {dimensions = array<i32: 0>} : vector<16x128xi32>
    %11 = tpu.iota {dimensions = array<i32: 1>} : vector<16x128xi32>
    %c2048_i32 = arith.constant 2048 : i32
    %12 = arith.muli %9, %c2048_i32 : i32
    %c128_i32 = arith.constant 128 : i32
    %13 = vector.broadcast %c128_i32 : i32 to vector<16x128xi32>
    %14 = arith.muli %10, %13 : vector<16x128xi32>
    %15 = vector.broadcast %12 : i32 to vector<16x128xi32>
    %16 = arith.addi %15, %14 : vector<16x128xi32>
    %17 = arith.addi %16, %11 : vector<16x128xi32>
    %c256_i32 = arith.constant 256 : i32
    %18 = vector.broadcast %c256_i32 : i32 to vector<16x128xi32>
    %19 = arith.cmpi slt, %17, %18 : vector<16x128xi32>
    %20 = math.log1p %7 : vector<16x128xf32>
    %21 = arith.subf %6, %20 : vector<16x128xf32>
    %22 = vector.broadcast %4 : f32 to vector<16x128xf32>
    %23 = arith.cmpf olt, %7, %22 : vector<16x128xf32>
    %24 = arith.andi %23, %19 : vector<16x128xi1>
    %cst_5 = arith.constant dense<true> : vector<16x128xi1>
    %25 = arith.xori %23, %cst_5 : vector<16x128xi1>
    %26 = arith.andi %25, %19 : vector<16x128xi1>
    %27 = arith.mulf %21, %21 : vector<16x128xf32>
    %28 = vector.broadcast %5 : f32 to vector<16x128xf32>
    %29 = arith.mulf %21, %28 : vector<16x128xf32>
    %cst_6 = arith.constant 0.000000e+00 : f32
    %30 = vector.broadcast %cst_6 : f32 to vector<16x128xf32>
    %31 = arith.subf %30, %29 : vector<16x128xf32>
    %cst_7 = arith.constant 0.000000e+00 : f32
    %32 = vector.broadcast %cst_7 : f32 to vector<16x128xf32>
    %33 = arith.maximumf %31, %32 : vector<16x128xf32>
    %34 = math.absf %29 : vector<16x128xf32>
    %cst_8 = arith.constant 0.000000e+00 : f32
    %35 = vector.broadcast %cst_8 : f32 to vector<16x128xf32>
    %36 = arith.subf %35, %34 : vector<16x128xf32>
    %37 = math.exp %36 : vector<16x128xf32>
    %38 = math.log1p %37 : vector<16x128xf32>
    %39 = arith.addf %33, %38 : vector<16x128xf32>
    %cst_9 = arith.constant 0.000000e+00 : f32
    %40 = vector.broadcast %cst_9 : f32 to vector<16x128xf32>
    %c0_10 = arith.constant 0 : index
    %c0_11 = arith.constant 0 : index
    %41 = vector.load %arg8[%c0_10, %c0_11] : memref<8x128xf32, #tpu.memory_space<vmem>>, vector<8x128xf32>
    %42 = arith.select %24, %27, %40 : vector<16x128xi1>, vector<16x128xf32>
    %43 = vector.shape_cast %42 : vector<16x128xf32> to vector<2x8x128xf32>
    %cst_12 = arith.constant dense<0.000000e+00> : vector<8x128xf32>
    %44 = vector.multi_reduction <add>, %43, %cst_12 [0] : vector<2x8x128xf32> to vector<8x128xf32>
    %45 = arith.addf %41, %44 : vector<8x128xf32>
    %c0_13 = arith.constant 0 : index
    %c0_14 = arith.constant 0 : index
    %46 = vector.load %arg8[%c0_13, %c0_14] : memref<8x128xf32, #tpu.memory_space<vmem>>, vector<8x128xf32>
    tpu.vector_store %arg8[%c0_13, %c0_14], %45 {strides = array<i32>} : memref<8x128xf32, #tpu.memory_space<vmem>>, vector<8x128xf32>,
    %c0_15 = arith.constant 0 : index
    %c0_16 = arith.constant 0 : index
    %47 = vector.load %arg9[%c0_15, %c0_16] : memref<8x128xf32, #tpu.memory_space<vmem>>, vector<8x128xf32>
    %48 = arith.select %26, %39, %40 : vector<16x128xi1>, vector<16x128xf32>
    %49 = vector.shape_cast %48 : vector<16x128xf32> to vector<2x8x128xf32>
    %cst_17 = arith.constant dense<0.000000e+00> : vector<8x128xf32>
    %50 = vector.multi_reduction <add>, %49, %cst_17 [0] : vector<2x8x128xf32> to vector<8x128xf32>
    %51 = arith.addf %47, %50 : vector<8x128xf32>
    %c0_18 = arith.constant 0 : index
    %c0_19 = arith.constant 0 : index
    %52 = vector.load %arg9[%c0_18, %c0_19] : memref<8x128xf32, #tpu.memory_space<vmem>>, vector<8x128xf32>
    tpu.vector_store %arg9[%c0_18, %c0_19], %51 {strides = array<i32>} : memref<8x128xf32, #tpu.memory_space<vmem>>, vector<8x128xf32>,
    %c0_20 = arith.constant 0 : index
    %c0_21 = arith.constant 0 : index
    %53 = vector.load %arg10[%c0_20, %c0_21] : memref<8x128xf32, #tpu.memory_space<vmem>>, vector<8x128xf32>
    %54 = arith.extui %24 : vector<16x128xi1> to vector<16x128xi32>
    %55 = arith.sitofp %54 : vector<16x128xi32> to vector<16x128xf32>
    %56 = vector.shape_cast %55 : vector<16x128xf32> to vector<2x8x128xf32>
    %cst_22 = arith.constant dense<0.000000e+00> : vector<8x128xf32>
    %57 = vector.multi_reduction <add>, %56, %cst_22 [0] : vector<2x8x128xf32> to vector<8x128xf32>
    %58 = arith.addf %53, %57 : vector<8x128xf32>
    %c0_23 = arith.constant 0 : index
    %c0_24 = arith.constant 0 : index
    %59 = vector.load %arg10[%c0_23, %c0_24] : memref<8x128xf32, #tpu.memory_space<vmem>>, vector<8x128xf32>
    tpu.vector_store %arg10[%c0_23, %c0_24], %58 {strides = array<i32>} : memref<8x128xf32, #tpu.memory_space<vmem>>, vector<8x128xf32>,
    %c0_i32_25 = arith.constant 0 : i32
    %60 = arith.cmpi eq, %arg1, %c0_i32_25 : i32
    %61 = arith.extui %60 : i1 to i32
    %c0_i32_26 = arith.constant 0 : i32
    %62 = arith.cmpi ne, %61, %c0_i32_26 : i32
    scf.if %62 {
      %c0_27 = arith.constant 0 : index
      %c0_28 = arith.constant 0 : index
      %63 = vector.load %arg8[%c0_27, %c0_28] : memref<8x128xf32, #tpu.memory_space<vmem>>, vector<8x128xf32>
      %64 = vector.shape_cast %63 : vector<8x128xf32> to vector<1x8x128xf32>
      %c0_29 = arith.constant 0 : index
      %c0_30 = arith.constant 0 : index
      %c0_31 = arith.constant 0 : index
      %65 = vector.load %arg5[%c0_29, %c0_30, %c0_31] : memref<1x8x128xf32, #tpu.memory_space<vmem>>, vector<1x8x128xf32>
      tpu.vector_store %arg5[%c0_29, %c0_30, %c0_31], %64 {strides = array<i32>} : memref<1x8x128xf32, #tpu.memory_space<vmem>>, vector<1x8x128xf32>,
      %c0_32 = arith.constant 0 : index
      %c0_33 = arith.constant 0 : index
      %66 = vector.load %arg9[%c0_32, %c0_33] : memref<8x128xf32, #tpu.memory_space<vmem>>, vector<8x128xf32>
      %67 = vector.shape_cast %66 : vector<8x128xf32> to vector<1x8x128xf32>
      %c0_34 = arith.constant 0 : index
      %c0_35 = arith.constant 0 : index
      %c0_36 = arith.constant 0 : index
      %68 = vector.load %arg6[%c0_34, %c0_35, %c0_36] : memref<1x8x128xf32, #tpu.memory_space<vmem>>, vector<1x8x128xf32>
      tpu.vector_store %arg6[%c0_34, %c0_35, %c0_36], %67 {strides = array<i32>} : memref<1x8x128xf32, #tpu.memory_space<vmem>>, vector<1x8x128xf32>,
      %c0_37 = arith.constant 0 : index
      %c0_38 = arith.constant 0 : index
      %69 = vector.load %arg10[%c0_37, %c0_38] : memref<8x128xf32, #tpu.memory_space<vmem>>, vector<8x128xf32>
      %70 = vector.shape_cast %69 : vector<8x128xf32> to vector<1x8x128xf32>
      %c0_39 = arith.constant 0 : index
      %c0_40 = arith.constant 0 : index
      %c0_41 = arith.constant 0 : index
      %71 = vector.load %arg7[%c0_39, %c0_40, %c0_41] : memref<1x8x128xf32, #tpu.memory_space<vmem>>, vector<1x8x128xf32>
      tpu.vector_store %arg7[%c0_39, %c0_40, %c0_41], %70 {strides = array<i32>} : memref<1x8x128xf32, #tpu.memory_space<vmem>>, vector<1x8x128xf32>,
    } else {
    }
    return
  }
  func.func @transform_0(%arg0: i32, %arg1: i32, %arg2: memref<2xf32, #tpu.memory_space<smem>>) -> (i32, i32) {
    %c1_i32 = arith.constant 1 : i32
    %0 = arith.muli %arg0, %c1_i32 : i32
    %1 = arith.addi %0, %arg1 : i32
    %c0_i32 = arith.constant 0 : i32
    %c0_i32_0 = arith.constant 0 : i32
    return %1, %c0_i32 : i32, i32
  }
  func.func @transform_1(%arg0: i32, %arg1: i32, %arg2: memref<2xf32, #tpu.memory_space<smem>>) -> (i32, i32) {
    %c1_i32 = arith.constant 1 : i32
    %0 = arith.muli %arg0, %c1_i32 : i32
    %1 = arith.addi %0, %arg1 : i32
    %c0_i32 = arith.constant 0 : i32
    %c0_i32_0 = arith.constant 0 : i32
    return %1, %c0_i32 : i32, i32
  }
  func.func @transform_2(%arg0: i32, %arg1: i32, %arg2: memref<2xf32, #tpu.memory_space<smem>>) -> (i32, i32, i32) {
    %c0_i32 = arith.constant 0 : i32
    %c0_i32_0 = arith.constant 0 : i32
    %c0_i32_1 = arith.constant 0 : i32
    return %arg0, %c0_i32, %c0_i32_0 : i32, i32, i32
  }
  func.func @transform_3(%arg0: i32, %arg1: i32, %arg2: memref<2xf32, #tpu.memory_space<smem>>) -> (i32, i32, i32) {
    %c0_i32 = arith.constant 0 : i32
    %c0_i32_0 = arith.constant 0 : i32
    %c0_i32_1 = arith.constant 0 : i32
    return %arg0, %c0_i32, %c0_i32_0 : i32, i32, i32
  }
  func.func @transform_4(%arg0: i32, %arg1: i32, %arg2: memref<2xf32, #tpu.memory_space<smem>>) -> (i32, i32, i32) {
    %c0_i32 = arith.constant 0 : i32
    %c0_i32_0 = arith.constant 0 : i32
    %c0_i32_1 = arith.constant 0 : i32
    return %arg0, %c0_i32, %c0_i32_0 : i32, i32, i32
  }
}

</mosaic_0001>

<llo_original>
// kernel: tpu_custom_call.1
$region0: #{tpu_custom_call.1}
  #allocation0 [shape = 'u32[]', space=smem, size = 0x4, offset = 0x4, fixed_abs, tag = 'smem constant byte address 0x4 - core index']
  #allocation1 [shape = 'u32[144,128]{1,0:T(1,128)}', space=vmem, size = 0x12000, scoped, tag = 'internal scratch']
  #allocation2 [shape = 'f32[8,128]{1,0:T(8,128)}', space=vmem, size = 0x1000, scoped, tag = 'scratch operand']
  #allocation3 [shape = 'f32[8,128]{1,0:T(8,128)}', space=vmem, size = 0x1000, scoped, tag = 'scratch operand']
  #allocation4 [shape = 'f32[8,128]{1,0:T(8,128)}', space=vmem, size = 0x1000, scoped, tag = 'scratch operand']
  #allocation5 [shape = 's32[1]{0}', space=sflag, size = 0x4, scoped, tag = 'scoped memory for tpu_custom_call.1']
  #allocation6 [shape = 'u8[512]{0}', space=smem, size = 0x200, scoped, tag = 'prefetched SMEM operand 0']
  %s0 = inlined_call_operand.hbm [shape: f32[2], index: 0, kind: input, shape index: {}]
  %s1 = inlined_call_operand.hbm [shape: f32[32,128], index: 1, kind: input, shape index: {}]
  %s2 = inlined_call_operand.hbm [shape: f32[32,128], index: 2, kind: input, shape index: {}]
  %s3 = inlined_call_operand.hbm [shape: f32[2,8,128], index: 3, kind: output, shape index: {0}]
  %s4 = inlined_call_operand.hbm [shape: f32[2,8,128], index: 4, kind: output, shape index: {1}]
  %s5 = inlined_call_operand.hbm [shape: f32[2,8,128], index: 5, kind: output, shape index: {2}]
  %6 = xla_tuple %s3, %s4, %s5
  %s7 = sld [smem:[#allocation0]]
  $region73: #{tpu_custom_call.1} parent=0
    _
  %s9 = ssub.s32 1, %s7
  %s10 = scalar_select 0, %s9, %s7
  %12 = dma.hbm_to_smem %s0, 16, [#allocation6], [#allocation5]
  %13 = dma.done [#allocation5], 16
  %14 = sfence
  $region1: #{tpu_custom_call.1} parent=0
    #allocation7 [shape = 'u8[16384]{0}', space=vmem, size = 0x4000, scoped, tag = 'input window, operand 1']
    #allocation8 [shape = 's32[2]{0}', space=sflag, size = 0x8, scoped, tag = 'scoped memory for tpu_custom_call.1']
    #allocation9 [shape = 's32[2]{0}', space=sflag, size = 0x8, scoped, tag = 'scoped memory for tpu_custom_call.1']
    #allocation10 [shape = 'u8[16384]{0}', space=vmem, size = 0x4000, scoped, tag = 'input window, operand 2']
    #allocation11 [shape = 's32[2]{0}', space=sflag, size = 0x8, scoped, tag = 'scoped memory for tpu_custom_call.1']
    #allocation12 [shape = 'u8[8192]{0}', space=vmem, size = 0x2000, scoped, tag = 'output window, operand 0']
    #allocation13 [shape = 'u8[8192]{0}', space=vmem, size = 0x2000, scoped, tag = 'output window, operand 1']
    #allocation14 [shape = 's32[2]{0}', space=sflag, size = 0x8, scoped, tag = 'scoped memory for tpu_custom_call.1']
    #allocation15 [shape = 'u8[8192]{0}', space=vmem, size = 0x2000, scoped, tag = 'output window, operand 2']
    %15 = vsyncpa [#allocation8], 0
    %s16 = scalar_lea.sflag [#allocation8], 1
    %17 = vsyncpa %s16, 0
    %18 = vsyncpa [#allocation11], 0
    %s19 = scalar_lea.sflag [#allocation11], 1
    %20 = vsyncpa %s19, 0
    %21 = vsyncpa [#allocation9], 0
    %s22 = scalar_lea.sflag [#allocation9], 1
    %23 = vsyncpa %s22, 0
    %24 = vsyncpa [#allocation14], 0
    %s25 = scalar_lea.sflag [#allocation14], 1
    %26 = vsyncpa %s25, 0
    loop: start=0, step=1, limit=4
    $region2: #{tpu_custom_call.1} parent=1 // loop_pre_header
      _
    $region3: #{tpu_custom_call.1} parent=1 // loop_header
      %s28 = sphi 0, %s32
      %p29 = scmp.ge.s32.totalorder %s28, 4
      %s35 = sphi 0, %s47
      %s36 = sphi 0, %s43
      %s37 = sphi 0, %s35
      %s38 = sphi 0, %s36
      %s39 = sphi 0, %s37
      %s40 = sphi 0, %s38
      %s52 = sphi 0, %s54
      %s55 = sphi 0, %s52
      %s56 = sphi 0, %s55
      %s72 = sphi 0, %s56
      %s80 = sphi 0, %s82
      %s83 = sphi 0, %s80
      %s84 = sphi 0, %s83
      %s100 = sphi 0, %s84
      %s106 = sphi 0, %s108
      %s109 = sphi 0, %s106
      %s110 = sphi 0, %s109
      %s126 = sphi 0, %s110
      %s132 = sphi 0, %s134
      %s135 = sphi 0, %s132
      %s136 = sphi 0, %s135
      %s152 = sphi 0, %s136
      %s158 = sphi 0, %s160
      %s161 = sphi 0, %s158
      %s162 = sphi 0, %s161
      %s178 = sphi 0, %s162
    $region4: #{tpu_custom_call.1} parent=1 // loop_header_branch
      %31 = sbr.rel (%p29) target = $region8
    $region5: #{tpu_custom_call.1} parent=1 // loop_body
      %s33 = ssub.s32 %s28, 1
      %s34 = ssub.s32 %s28, 2
      %s41 = sadd.s32 1, %s36
      %p42 = scmp.ge.s32.totalorder %s41, 1
      %s43 = scalar_select %p42, 0, %s41
      %s44 = sadd.s32 1, %s35
      %s45 = scalar_select %p42, %s44, %s35
      %p46 = scmp.ge.s32.totalorder %s45, 2
      %s47 = scalar_select %p46, 0, %s45
      %s48 = sadd.s32 %s35, %s36
      %s49 = sadd.s32 %s47, %s43
      %s50 = ssub.s32 %s48, %s49
      %p51 = scmp.eq.s32.totalorder %s50, 0
      %s53 = sadd.s32 %s52, 1
      %s54 = scalar_select %p51, %s52, %s53
      %p57 = pneg %p51
      %p58 = scmp.eq.s32.totalorder %s28, 1
      %p59 = por %p57, %p58
      %p60 = scmp.ne.s32.totalorder %s52, %s55
      %p61 = scmp.eq.s32.totalorder %s28, 0
      %p62 = por %p60, %p61
      %p63 = scmp.ne.s32.totalorder %s52, %s55
      %p64 = scmp.eq.s32.totalorder %s33, 1
      %p65 = por %p63, %p64
      %p66 = scmp.ne.s32.totalorder %s55, %s56
      %p67 = scmp.eq.s32.totalorder %s33, 0
      %p68 = por %p66, %p67
      %p69 = scmp.ne.s32.totalorder %s55, %s56
      %p70 = scmp.eq.s32.totalorder %s34, 1
      %p71 = por %p69, %p70
      %p73 = scmp.ne.s32.totalorder %s56, %s72
      %p74 = scmp.eq.s32.totalorder %s34, 0
      %p75 = por %p73, %p74
      %s76 = sadd.s32 %s35, %s36
      %s77 = sadd.s32 %s47, %s43
      %s78 = ssub.s32 %s76, %s77
      %p79 = scmp.eq.s32.totalorder %s78, 0
      %s81 = sadd.s32 %s80, 1
      %s82 = scalar_select %p79, %s80, %s81
      %p85 = pneg %p79
      %p86 = scmp.eq.s32.totalorder %s28, 1
      %p87 = por %p85, %p86
      %p88 = scmp.ne.s32.totalorder %s80, %s83
      %p89 = scmp.eq.s32.totalorder %s28, 0
      %p90 = por %p88, %p89
      %p91 = scmp.ne.s32.totalorder %s80, %s83
      %p92 = scmp.eq.s32.totalorder %s33, 1
      %p93 = por %p91, %p92
      %p94 = scmp.ne.s32.totalorder %s83, %s84
      %p95 = scmp.eq.s32.totalorder %s33, 0
      %p96 = por %p94, %p95
      %p97 = scmp.ne.s32.totalorder %s83, %s84
      %p98 = scmp.eq.s32.totalorder %s34, 1
      %p99 = por %p97, %p98
      %p101 = scmp.ne.s32.totalorder %s84, %s100
      %p102 = scmp.eq.s32.totalorder %s34, 0
      %p103 = por %p101, %p102
      %s104 = ssub.s32 %s35, %s47
      %p105 = scmp.eq.s32.totalorder %s104, 0
      %s107 = sadd.s32 %s106, 1
      %s108 = scalar_select %p105, %s106, %s107
      %p111 = pneg %p105
      %p112 = scmp.eq.s32.totalorder %s28, 1
      %p113 = por %p111, %p112
      %p114 = scmp.ne.s32.totalorder %s106, %s109
      %p115 = scmp.eq.s32.totalorder %s28, 0
      %p116 = por %p114, %p115
      %p117 = scmp.ne.s32.totalorder %s106, %s109
      %p118 = scmp.eq.s32.totalorder %s33, 1
      %p119 = por %p117, %p118
      %p120 = scmp.ne.s32.totalorder %s109, %s110
      %p121 = scmp.eq.s32.totalorder %s33, 0
      %p122 = por %p120, %p121
      %p123 = scmp.ne.s32.totalorder %s109, %s110
      %p124 = scmp.eq.s32.totalorder %s34, 1
      %p125 = por %p123, %p124
      %p127 = scmp.ne.s32.totalorder %s110, %s126
      %p128 = scmp.eq.s32.totalorder %s34, 0
      %p129 = por %p127, %p128
      %s130 = ssub.s32 %s35, %s47
      %p131 = scmp.eq.s32.totalorder %s130, 0
      %s133 = sadd.s32 %s132, 1
      %s134 = scalar_select %p131, %s132, %s133
      %p137 = pneg %p131
      %p138 = scmp.eq.s32.totalorder %s28, 1
      %p139 = por %p137, %p138
      %p140 = scmp.ne.s32.totalorder %s132, %s135
      %p141 = scmp.eq.s32.totalorder %s28, 0
      %p142 = por %p140, %p141
      %p143 = scmp.ne.s32.totalorder %s132, %s135
      %p144 = scmp.eq.s32.totalorder %s33, 1
      %p145 = por %p143, %p144
      %p146 = scmp.ne.s32.totalorder %s135, %s136
      %p147 = scmp.eq.s32.totalorder %s33, 0
      %p148 = por %p146, %p147
      %p149 = scmp.ne.s32.totalorder %s135, %s136
      %p150 = scmp.eq.s32.totalorder %s34, 1
      %p151 = por %p149, %p150
      %p153 = scmp.ne.s32.totalorder %s136, %s152
      %p154 = scmp.eq.s32.totalorder %s34, 0
      %p155 = por %p153, %p154
      %s156 = ssub.s32 %s35, %s47
      %p157 = scmp.eq.s32.totalorder %s156, 0
      %s159 = sadd.s32 %s158, 1
      %s160 = scalar_select %p157, %s158, %s159
      %p163 = pneg %p157
      %p164 = scmp.eq.s32.totalorder %s28, 1
      %p165 = por %p163, %p164
      %p166 = scmp.ne.s32.totalorder %s158, %s161
      %p167 = scmp.eq.s32.totalorder %s28, 0
      %p168 = por %p166, %p167
      %p169 = scmp.ne.s32.totalorder %s158, %s161
      %p170 = scmp.eq.s32.totalorder %s33, 1
      %p171 = por %p169, %p170
      %p172 = scmp.ne.s32.totalorder %s161, %s162
      %p173 = scmp.eq.s32.totalorder %s33, 0
      %p174 = por %p172, %p173
      %p175 = scmp.ne.s32.totalorder %s161, %s162
      %p176 = scmp.eq.s32.totalorder %s34, 1
      %p177 = por %p175, %p176
      %p179 = scmp.ne.s32.totalorder %s162, %s178
      %p180 = scmp.eq.s32.totalorder %s34, 0
      %p181 = por %p179, %p180
      %p182 = scmp.le.s32.totalorder 1, %s28
      %p183 = scmp.lt.s32.totalorder %s28, 3
      %p184 = pnand %p182, %p183
      %p185 = pneg %p184
      // Predicated region
      $region9: #{tpu_custom_call.1} parent=5 // pred_check
        _
      $region10: #{tpu_custom_call.1} parent=5 // pred_check_branch
        %187 = sbr.rel (%p184) target = $region12
      $region11: #{tpu_custom_call.1} parent=5 // pred_region
        %s188 = ssub.s32 %s28, 1
      $region12: #{tpu_custom_call.1} parent=5 // pred_fallthru
        _
      %p189 = scmp.lt.s32.totalorder %s28, 2
      // Predicated region
      $region13: #{tpu_custom_call.1} parent=5 // pred_check
        %p190 = pneg %p189
      $region14: #{tpu_custom_call.1} parent=5 // pred_check_branch
        %192 = sbr.rel (%p190) target = $region16
      $region15: #{tpu_custom_call.1} parent=5 // pred_region
        // Predicated region
        $region17: #{tpu_custom_call.1} parent=15 // pred_check
          %p193 = pneg %p62
        $region18: #{tpu_custom_call.1} parent=15 // pred_check_branch
          %195 = sbr.rel (%p193) target = $region20
        $region19: #{tpu_custom_call.1} parent=15 // pred_region
          %s196 = sand.u32 %s52, 1
          %s197 = scalar_lea.sflag [#allocation8], %s196
          %s198 = sand.u32 %s52, 1
          %s199 = smul.addr %s198, 16
          %s200 = scalar_lea.vmem [#allocation7], %s199
          %s201 = sadd.s32 %s35, %s36
          %s202 = smul.u32 2, %s201
          %s204 = ssub.s32 256, 256
          %205 = vsyncadd %s197, %s204
          %s206 = smul.addr %s202, 128
          %s207 = scalar_lea.hbm %s1, %s206
          %s208 = sshll.u32 %s200, 4
          %s209 = int_to_ptr.vmem [resolvable:$true] %s208
          %214 = dma.hbm_to_vmem [thread:$0]  %s207, 256, %s209, %s197, 128, 128, 8
        $region20: #{tpu_custom_call.1} parent=15 // pred_fallthru
          _
        // Predicated region
        $region21: #{tpu_custom_call.1} parent=15 // pred_check
          %p215 = pneg %p90
        $region22: #{tpu_custom_call.1} parent=15 // pred_check_branch
          %217 = sbr.rel (%p215) target = $region24
        $region23: #{tpu_custom_call.1} parent=15 // pred_region
          %s218 = sand.u32 %s80, 1
          %s219 = scalar_lea.sflag [#allocation11], %s218
          %s220 = sand.u32 %s80, 1
          %s221 = smul.addr %s220, 16
          %s222 = scalar_lea.vmem [#allocation10], %s221
          %s223 = sadd.s32 %s35, %s36
          %s224 = smul.u32 2, %s223
          %s226 = ssub.s32 256, 256
          %227 = vsyncadd %s219, %s226
          %s228 = smul.addr %s224, 128
          %s229 = scalar_lea.hbm %s2, %s228
          %s230 = sshll.u32 %s222, 4
          %s231 = int_to_ptr.vmem [resolvable:$true] %s230
          %236 = dma.hbm_to_vmem [thread:$0]  %s229, 256, %s231, %s219, 128, 128, 8
        $region24: #{tpu_custom_call.1} parent=15 // pred_fallthru
          _
      $region16: #{tpu_custom_call.1} parent=5 // pred_fallthru
        _
      %p237 = scmp.le.s32.totalorder 1, %s28
      %p238 = scmp.lt.s32.totalorder %s28, 3
      %p239 = pnand %p237, %p238
      %p240 = pneg %p239
      // Predicated region
      $region25: #{tpu_custom_call.1} parent=5 // pred_check
        _
      $region26: #{tpu_custom_call.1} parent=5 // pred_check_branch
        %242 = sbr.rel (%p239) target = $region28
      $region27: #{tpu_custom_call.1} parent=5 // pred_region
        %s243 = ssub.s32 %s28, 1
        %s244 = sand.u32 %s55, 1
        %s245 = scalar_lea.sflag [#allocation8], %s244
        %s246 = sand.u32 %s55, 1
        %s247 = smul.addr %s246, 16
        %s248 = scalar_lea.vmem [#allocation7], %s247
        // Predicated region
        $region29: #{tpu_custom_call.1} parent=27 // pred_check
          %p249 = pneg %p68
        $region30: #{tpu_custom_call.1} parent=27 // pred_check_branch
          %251 = sbr.rel (%p249) target = $region32
        $region31: #{tpu_custom_call.1} parent=27 // pred_region
          %252 = dma.done %s245, 256
        $region32: #{tpu_custom_call.1} parent=27 // pred_fallthru
          _
        %s253 = sand.u32 %s83, 1
        %s254 = scalar_lea.sflag [#allocation11], %s253
        %s255 = sand.u32 %s83, 1
        %s256 = smul.addr %s255, 16
        %s257 = scalar_lea.vmem [#allocation10], %s256
        // Predicated region
        $region33: #{tpu_custom_call.1} parent=27 // pred_check
          %p258 = pneg %p96
        $region34: #{tpu_custom_call.1} parent=27 // pred_check_branch
          %260 = sbr.rel (%p258) target = $region36
        $region35: #{tpu_custom_call.1} parent=27 // pred_region
          %261 = dma.done %s254, 256
        $region36: #{tpu_custom_call.1} parent=27 // pred_fallthru
          _
        %s262 = sand.u32 %s55, 1
        %s263 = scalar_lea.sflag [#allocation8], %s262
        %s264 = sand.u32 %s55, 1
        %s265 = smul.addr %s264, 16
        %s266 = scalar_lea.vmem [#allocation7], %s265
        %p267 = pneg %p68
        %p268 = pneg %p65
        %s269 = sand.u32 %s83, 1
        %s270 = scalar_lea.sflag [#allocation11], %s269
        %s271 = sand.u32 %s83, 1
        %s272 = smul.addr %s271, 16
        %s273 = scalar_lea.vmem [#allocation10], %s272
        %p274 = pneg %p96
        %p275 = pneg %p93
        %p276 = pneg %p122
        %p277 = pneg %p119
        %s278 = sand.u32 %s109, 1
        %s279 = scalar_lea.sflag [#allocation9], %s278
        %s280 = sand.u32 %s109, 1
        %s281 = smul.addr %s280, 8
        %s282 = scalar_lea.vmem [#allocation12], %s281
        %p283 = pneg %p148
        %p284 = pneg %p145
        %s285 = sand.u32 %s33, 1
        %s286 = scalar_lea.sflag [#allocation14], %s285
        %s287 = sand.u32 %s135, 1
        %s288 = smul.addr %s287, 8
        %s289 = scalar_lea.vmem [#allocation13], %s288
        %p290 = pneg %p174
        %p291 = pneg %p171
        %s292 = sand.u32 %s33, 1
        %s293 = scalar_lea.sflag [#allocation14], %s292
        %s294 = sand.u32 %s161, 1
        %s295 = smul.addr %s294, 8
        %s296 = scalar_lea.vmem [#allocation15], %s295
        %s297 = sadd.s32 %s37, %s38
        %s298 = smul.u32 2, %s297
        %s299 = sadd.s32 %s37, %s38
        %s300 = smul.u32 2, %s299
        %p301 = scmp.eq.s32.totalorder %s38, 0
        // Predicated region
        $region37: #{tpu_custom_call.1} parent=27 // pred_check
          %p302 = pneg %p301
        $region38: #{tpu_custom_call.1} parent=27 // pred_check_branch
          %304 = sbr.rel (%p302) target = $region40
        $region39: #{tpu_custom_call.1} parent=27 // pred_region
          %305 = vst [vmem:[#allocation2] sm:$0xff] 0.0
          %306 = vst [vmem:[#allocation3] sm:$0xff] 0.0
          %307 = vst [vmem:[#allocation4] sm:$0xff] 0.0
        $region40: #{tpu_custom_call.1} parent=27 // pred_fallthru
          _
        %s308 = sld [smem:[#allocation6]]
        %s309 = sld [smem:[#allocation6 + $0x1]]
        %v310 = vstv %s308
        %v311 = vrcp.pop %v310
        %s312 = vtos %v311
        %s313 = smul.f32 1.6, %s312
        %v314 = vld [vmem:[%s248] sm:$0xff]
        %v315 = vld [vmem:[%s248 + $0x8] sm:$0xff]
        %v316 = vld [vmem:[%s257] sm:$0xff]
        %v317 = vld [vmem:[%s257 + $0x8] sm:$0xff]
        %s318 = sadd.s32 %s37, %s38
        %v319 = vlaneseq
        %v320 = vshrl.u32 %v319, 7
        %v321 = vadd.s32 %v320, 8
        %v322 = vlaneseq
        %v323 = vand.u32 %v322, 127
        %s324 = smul.u32 %s318, 2048
        %v325 = vmul.u32 %v320, 128
        %v326 = vmul.u32 %v321, 128
        %v327 = vstv %s324
        %v328 = vadd.s32 %v327, %v325
        %v329 = vadd.s32 %v327, %v326
        %v330 = vadd.s32 %v328, %v323
        %v331 = vadd.s32 %v329, %v323
        %vm332 = vcmp.lt.s32.totalorder %v330, 256
        %vm333 = vcmp.lt.s32.totalorder %v331, 256
        %v334 = vadd.f32 %v316, 1.0
        %v335 = vlog2.pop %v334
        %v336 = vmul.f32 %v335, 0.6931472
        %v337 = vmul.f32 -0.5, %v316
        %v338 = vadd.f32 %v337, 1.0
        %v339 = vmul.f32 %v338, %v316
        %v340 = vand.u32 2147483647, %v316
        %vm341 = vcmp.lt.f32.partialorder %v340, 0.0004427343
        %v342 = vsel %vm341, %v339, %v336
        %v343 = vadd.f32 %v317, 1.0
        %v344 = vlog2.pop %v343
        %v345 = vmul.f32 %v344, 0.6931472
        %v346 = vmul.f32 -0.5, %v317
        %v347 = vadd.f32 %v346, 1.0
        %v348 = vmul.f32 %v347, %v317
        %v349 = vand.u32 2147483647, %v317
        %vm350 = vcmp.lt.f32.partialorder %v349, 0.0004427343
        %v351 = vsel %vm350, %v348, %v345
        %v352 = vsub.f32 %v314, %v342
        %v353 = vsub.f32 %v315, %v351
        %v354 = vstv %s309
        %vm355 = vcmp.lt.f32.partialorder %v316, %v354
        %vm356 = vcmp.lt.f32.partialorder %v317, %v354
        %vm357 = vmand %vm355, %vm332
        %vm358 = vmand %vm356, %vm333
        %vm359 = vmxor %vm355, 1
        %vm360 = vmxor %vm356, 1
        %vm361 = vmand %vm359, %vm332
        %vm362 = vmand %vm360, %vm333
        %v363 = vmul.f32 %v352, %v352
        %v364 = vmul.f32 %v353, %v353
        %v365 = vstv %s313
        %v366 = vmul.f32 %v352, %v365
        %v367 = vmul.f32 %v353, %v365
        %v368 = vsub.f32 0.0, %v366
        %v369 = vsub.f32 0.0, %v367
        %v370 = vmax.f32 %v368, 0.0
        %v371 = vmax.f32 %v369, 0.0
        %v372 = vand.u32 2147483647, %v366
        %v373 = vand.u32 2147483647, %v367
        %v374 = vsub.f32 0.0, %v372
        %v375 = vsub.f32 0.0, %v373
        %v376 = vmul.f32 %v374, 1.442695
        %v377 = vpow.pop %v376
        %v378 = vmul.f32 %v375, 1.442695
        %v379 = vpow.pop %v378
        %v380 = vadd.f32 %v377, 1.0
        %v381 = vlog2.pop %v380
        %v382 = vmul.f32 %v381, 0.6931472
        %v383 = vmul.f32 -0.5, %v377
        %v384 = vadd.f32 %v383, 1.0
        %v385 = vmul.f32 %v384, %v377
        %v386 = vand.u32 2147483647, %v377
        %vm387 = vcmp.lt.f32.partialorder %v386, 0.0004427343
        %v388 = vsel %vm387, %v385, %v382
        %v389 = vadd.f32 %v379, 1.0
        %v390 = vlog2.pop %v389
        %v391 = vmul.f32 %v390, 0.6931472
        %v392 = vmul.f32 -0.5, %v379
        %v393 = vadd.f32 %v392, 1.0
        %v394 = vmul.f32 %v393, %v379
        %v395 = vand.u32 2147483647, %v379
        %vm396 = vcmp.lt.f32.partialorder %v395, 0.0004427343
        %v397 = vsel %vm396, %v394, %v391
        %v398 = vadd.f32 %v370, %v388
        %v399 = vadd.f32 %v371, %v397
        %v400 = vld [vmem:[#allocation2] sm:$0xff]
        %v401 = vsel %vm357, %v363, 0.0
        %v402 = vsel %vm358, %v364, 0.0
        %v403 = vadd.f32 %v401, %v402
        %v404 = vadd.f32 %v400, %v403
        %405 = vst [vmem:[#allocation2] sm:$0xff] %v404
        %v406 = vld [vmem:[#allocation3] sm:$0xff]
        %v407 = vsel %vm361, %v398, 0.0
        %v408 = vsel %vm362, %v399, 0.0
        %v409 = vadd.f32 %v407, %v408
        %v410 = vadd.f32 %v406, %v409
        %411 = vst [vmem:[#allocation3] sm:$0xff] %v410
        %v412 = vld [vmem:[#allocation4] sm:$0xff]
        %v413 = vsel %vm357, 1, 0
        %v414 = vsel %vm358, 1, 0
        %v415 = vcvt.s32.f32 %v413
        %v416 = vcvt.s32.f32 %v414
        %v417 = vadd.f32 %v415, %v416
        %v418 = vadd.f32 %v412, %v417
        %419 = vst [vmem:[#allocation4] sm:$0xff] %v418
        // Predicated region
        $region41: #{tpu_custom_call.1} parent=27 // pred_check
          %p420 = pneg %p301
        $region42: #{tpu_custom_call.1} parent=27 // pred_check_branch
          %422 = sbr.rel (%p420) target = $region44
        $region43: #{tpu_custom_call.1} parent=27 // pred_region
          %v423 = vld [vmem:[#allocation2] sm:$0xff]
          %424 = vst [vmem:[%s282] sm:$0xff] %v423
          %v425 = vld [vmem:[#allocation3] sm:$0xff]
          %426 = vst [vmem:[%s289] sm:$0xff] %v425
          %v427 = vld [vmem:[#allocation4] sm:$0xff]
          %428 = vst [vmem:[%s296] sm:$0xff] %v427
        $region44: #{tpu_custom_call.1} parent=27 // pred_fallthru
          _
        %s429 = sand.u32 %s109, 1
        %s430 = scalar_lea.sflag [#allocation9], %s429
        %s431 = sand.u32 %s109, 1
        %s432 = smul.addr %s431, 8
        %s433 = scalar_lea.vmem [#allocation12], %s432
        %s434 = sand.u32 %s33, 1
        %s435 = scalar_lea.sflag [#allocation14], %s434
        %s436 = sand.u32 %s135, 1
        %s437 = smul.addr %s436, 8
        %s438 = scalar_lea.vmem [#allocation13], %s437
        %s439 = sand.u32 %s33, 1
        %s440 = scalar_lea.sflag [#allocation14], %s439
        %s441 = sand.u32 %s161, 1
        %s442 = smul.addr %s441, 8
        %s443 = scalar_lea.vmem [#allocation15], %s442
        // Predicated region
        $region45: #{tpu_custom_call.1} parent=27 // pred_check
          %p444 = pneg %p119
        $region46: #{tpu_custom_call.1} parent=27 // pred_check_branch
          %446 = sbr.rel (%p444) target = $region48
        $region47: #{tpu_custom_call.1} parent=27 // pred_region
          %s448 = ssub.s32 128, 128
          %449 = vsyncadd %s430, %s448
          %s450 = smul.addr %s37, 128
          %s451 = scalar_lea.hbm %s3, %s450
          %s453 = sshll.u32 %s433, 4
          %s454 = int_to_ptr.vmem [resolvable:$true] %s453
          %456 = dma.vmem_to_hbm [thread:$0]  %s454, 128, %s451, %s430
        $region48: #{tpu_custom_call.1} parent=27 // pred_fallthru
          _
        // Predicated region
        $region49: #{tpu_custom_call.1} parent=27 // pred_check
          %p457 = pneg %p145
        $region50: #{tpu_custom_call.1} parent=27 // pred_check_branch
          %459 = sbr.rel (%p457) target = $region52
        $region51: #{tpu_custom_call.1} parent=27 // pred_region
          %s461 = ssub.s32 128, 128
          %462 = vsyncadd %s435, %s461
          %s463 = smul.addr %s37, 128
          %s464 = scalar_lea.hbm %s4, %s463
          %s466 = sshll.u32 %s438, 4
          %s467 = int_to_ptr.vmem [resolvable:$true] %s466
          %469 = dma.vmem_to_hbm [thread:$0]  %s467, 128, %s464, %s435
        $region52: #{tpu_custom_call.1} parent=27 // pred_fallthru
          _
        // Predicated region
        $region53: #{tpu_custom_call.1} parent=27 // pred_check
          %p470 = pneg %p171
        $region54: #{tpu_custom_call.1} parent=27 // pred_check_branch
          %472 = sbr.rel (%p470) target = $region56
        $region55: #{tpu_custom_call.1} parent=27 // pred_region
          %s474 = ssub.s32 128, 128
          %475 = vsyncadd %s440, %s474
          %s476 = smul.addr %s37, 128
          %s477 = scalar_lea.hbm %s5, %s476
          %s479 = sshll.u32 %s443, 4
          %s480 = int_to_ptr.vmem [resolvable:$true] %s479
          %482 = dma.vmem_to_hbm [thread:$0]  %s480, 128, %s477, %s440
        $region56: #{tpu_custom_call.1} parent=27 // pred_fallthru
          _
      $region28: #{tpu_custom_call.1} parent=5 // pred_fallthru
        _
      %p483 = scmp.le.s32.totalorder 2, %s28
      // Predicated region
      $region57: #{tpu_custom_call.1} parent=5 // pred_check
        %p484 = pneg %p483
      $region58: #{tpu_custom_call.1} parent=5 // pred_check_branch
        %486 = sbr.rel (%p484) target = $region60
      $region59: #{tpu_custom_call.1} parent=5 // pred_region
        %s487 = ssub.s32 %s28, 2
        // Predicated region
        $region61: #{tpu_custom_call.1} parent=59 // pred_check
          %p488 = pneg %p125
        $region62: #{tpu_custom_call.1} parent=59 // pred_check_branch
          %490 = sbr.rel (%p488) target = $region64
        $region63: #{tpu_custom_call.1} parent=59 // pred_region
          %s491 = sand.u32 %s110, 1
          %s492 = scalar_lea.sflag [#allocation9], %s491
          %s493 = sand.u32 %s110, 1
          %s494 = smul.addr %s493, 8
          %s495 = scalar_lea.vmem [#allocation12], %s494
          %496 = dma.done %s492, 128
        $region64: #{tpu_custom_call.1} parent=59 // pred_fallthru
          _
        // Predicated region
        $region65: #{tpu_custom_call.1} parent=59 // pred_check
          %p497 = pneg %p151
        $region66: #{tpu_custom_call.1} parent=59 // pred_check_branch
          %499 = sbr.rel (%p497) target = $region68
        $region67: #{tpu_custom_call.1} parent=59 // pred_region
          %s500 = sand.u32 %s34, 1
          %s501 = scalar_lea.sflag [#allocation14], %s500
          %s502 = sand.u32 %s136, 1
          %s503 = smul.addr %s502, 8
          %s504 = scalar_lea.vmem [#allocation13], %s503
          %505 = dma.done %s501, 128
        $region68: #{tpu_custom_call.1} parent=59 // pred_fallthru
          _
        // Predicated region
        $region69: #{tpu_custom_call.1} parent=59 // pred_check
          %p506 = pneg %p177
        $region70: #{tpu_custom_call.1} parent=59 // pred_check_branch
          %508 = sbr.rel (%p506) target = $region72
        $region71: #{tpu_custom_call.1} parent=59 // pred_region
          %s509 = sand.u32 %s34, 1
          %s510 = scalar_lea.sflag [#allocation14], %s509
          %s511 = sand.u32 %s162, 1
          %s512 = smul.addr %s511, 8
          %s513 = scalar_lea.vmem [#allocation15], %s512
          %514 = dma.done %s510, 128
        $region72: #{tpu_custom_call.1} parent=59 // pred_fallthru
          _
      $region60: #{tpu_custom_call.1} parent=5 // pred_fallthru
        _
    $region6: #{tpu_custom_call.1} parent=1 // loop_footer
      %s32 = sadd.s32 1, %s28
    $region7: #{tpu_custom_call.1} parent=1 // loop_footer_branch
      %27 = sbr.rel target = $region3
    $region8: #{tpu_custom_call.1} parent=1 // loop_exit
      _
    %515 = vsyncpa [#allocation8], 1
    %s516 = scalar_lea.sflag [#allocation8], 1
    %517 = vsyncpa %s516, 1
    %518 = vsyncpa [#allocation11], 1
    %s519 = scalar_lea.sflag [#allocation11], 1
    %520 = vsyncpa %s519, 1
    %521 = vsyncpa [#allocation9], 1
    %s522 = scalar_lea.sflag [#allocation9], 1
    %523 = vsyncpa %s522, 1
    %524 = vsyncpa [#allocation14], 1
    %s525 = scalar_lea.sflag [#allocation14], 1
    %526 = vsyncpa %s525, 1

</llo_original>
